<compile_context>
chip_gen: v6e
topology: v6e:2x2x1
jax: 0.10.0
libtpu: 0.0.40
codegen_flags: <defaults>
</compile_context>

<pallas_src>
import numpy as np
import jax
import jax.numpy as jnp
from jax.experimental import pallas as pl
from jax.experimental.pallas import tpu as pltpu


def _frequency_bias_kernel(scale_ref, invt_ref, bias_ref, logits_ref, out_ref):
    # grid = (B, S // ts, V // tv); every tile is independent.
    bi = pl.program_id(0)
    scale = scale_ref[bi]          # per-batch  sigmoid(ctx @ W^T + b) / temperature
    inv_t = invt_ref[0]            # 1 / temperature

    bias_scaled = bias_ref[...] * scale                      # (1, tv)  -- small tile
    out_ref[...] = logits_ref[...] * inv_t + bias_scaled[:, None, :]


def _pick_tiles(S, V, elem_bytes=4, tile_budget_bytes=16 * 1024 * 1024):
    """Pick (ts, tv): lane-dense vocab tile first, then the seq tile, keeping the
    double-buffered logits-in + out working set (4 * ts * tv * elem_bytes) under
    the budget so it fits comfortably on v7x (64 MiB VMEM) and v5e/v6e."""
    def divisors(n, step):
        if n % step != 0:
            return [n]
        return [d for d in range(step, n + 1, step) if n % d == 0]

    ts_cands = divisors(S, 8)       # seq tile: multiple of 8 (sublane) or full S
    tv_cands = divisors(V, 128)     # vocab tile: multiple of 128 (lane) or full V
    ts_min = ts_cands[0]

    def tile_bytes(ts, tv):
        return 4 * ts * tv * elem_bytes

    tv = max([t for t in tv_cands if tile_bytes(ts_min, t) <= tile_budget_bytes],
             default=tv_cands[0])
    ts = max([t for t in ts_cands if tile_bytes(t, tv) <= tile_budget_bytes],
             default=ts_min)
    return ts, tv


def frequency_bias_forward(logits, hidden_states, bias_vector, w, b, temperature):
    """logits: [B,S,V] f32, hidden_states: [B,S,H] f32, bias_vector: [V] f32,
    w: [1,H] f32 (context_modulator weight), b: [1,1] f32 (its bias)."""
    B, S, V = logits.shape

    inv_t = jnp.float32(1.0) / jnp.asarray(temperature, dtype=jnp.float32)

    # Hoisted O(B*H) context modulation (kernel body is O(B*S*V) streaming).
    ctx = jnp.mean(hidden_states.astype(jnp.float32), axis=1)         # [B, H]
    mod = jax.nn.sigmoid(ctx @ w.T + b)                               # [B, 1]
    scale = (mod[:, 0] * inv_t).astype(jnp.float32)                   # [B]
    inv_t_arr = jnp.reshape(inv_t, (1,)).astype(jnp.float32)          # [1]

    ts, tv = _pick_tiles(S, V)
    grid = (B, S // ts, V // tv)

    return pl.pallas_call(
        _frequency_bias_kernel,
        out_shape=jax.ShapeDtypeStruct((B, S, V), logits.dtype),
        grid_spec=pltpu.PrefetchScalarGridSpec(
            num_scalar_prefetch=0,
            grid=grid,
            in_specs=[
                # per-batch modulation * inv_t, scalar-read from SMEM
                pl.BlockSpec(memory_space=pltpu.MemorySpace.SMEM),
                # 1 / temperature (runtime value -> no recompile per agent)
                pl.BlockSpec(memory_space=pltpu.MemorySpace.SMEM),
                # bias_vector as [1, V], lane-dense tile
                pl.BlockSpec((1, tv), lambda bi, si, vj: (0, vj)),
                # logits tile
                pl.BlockSpec((1, ts, tv), lambda bi, si, vj: (bi, si, vj)),
            ],
            out_specs=pl.BlockSpec((1, ts, tv), lambda bi, si, vj: (bi, si, vj)),
        ),
        compiler_params=pltpu.CompilerParams(
            dimension_semantics=("parallel", "parallel", "parallel"),
            vmem_limit_bytes=32 * 1024 * 1024),
    )(scale, inv_t_arr, bias_vector.reshape(1, V), logits)


def init_bias_vector(vocab_size, agent_id, bias_strength, key):
    """Deterministic analogue of FrequencyBias._initialize_biases:
    randn * 0.01 -> FFT -> per-agent phase shift -> real(iFFT) -> * strength."""
    base = jax.random.normal(key, (vocab_size,), dtype=jnp.float32) * 0.01
    freqs = jnp.fft.fft(base)
    phase_shift = 2.0 * np.pi * agent_id / 5.0
    freqs = freqs * jnp.exp(1j * phase_shift *
                            jnp.arange(vocab_size, dtype=jnp.float32))
    return (jnp.real(jnp.fft.ifft(freqs)) * bias_strength).astype(jnp.float32)


if __name__ == "__main__":
    # Small, forward-consistent shapes.
    B, S, V, H = 2, 8, 512, 32
    agent_id = 1
    bias_strength = 0.15
    temperature_range = (0.7, 1.3)
    temperature = (temperature_range[0]
                   + (temperature_range[1] - temperature_range[0]) * (agent_id / 4))

    key = jax.random.PRNGKey(0)
    k_logits, k_hidden, k_bias, k_w, k_b = jax.random.split(key, 5)

    logits = jax.random.normal(k_logits, (B, S, V), dtype=jnp.float32)
    hidden_states = jax.random.normal(k_hidden, (B, S, H), dtype=jnp.float32)

    bias_vector = init_bias_vector(V, agent_id, bias_strength, k_bias)

    # context_modulator = nn.Linear(H, 1); uniform(-1/sqrt(H), 1/sqrt(H)) init.
    bound = 1.0 / np.sqrt(H)
    w = jax.random.uniform(k_w, (1, H), minval=-bound, maxval=bound,
                           dtype=jnp.float32)
    b = jax.random.uniform(k_b, (1, 1), minval=-bound, maxval=bound,
                           dtype=jnp.float32)

    out = frequency_bias_forward(logits, hidden_states, bias_vector, w, b,
                                 temperature)
    out = jax.block_until_ready(out)

    # Pure-JAX reference for correctness.
    ctx = hidden_states.mean(axis=1)                                   # [B, H]
    mod = jax.nn.sigmoid(ctx @ w.T + b)[:, :, None]                    # [B, 1, 1]
    ref = (logits + bias_vector[None, None, :] * mod) / temperature
    np.testing.assert_allclose(np.asarray(out), np.asarray(ref),
                               rtol=1e-5, atol=1e-5)

    # TODO(synk): hidden_states=None path (unmodulated bias) handled in the
    # wrapper by passing mod=1 if ever needed; kernel itself is unchanged.
    print("KERNEL_OK")
</pallas_src>

<mosaic_0001>
module attributes {stable_mosaic.version = 11 : i64} {
  func.func @_frequency_bias_kernel(%arg0: i32, %arg1: i32, %arg2: i32, %arg3: memref<2xf32, #tpu.memory_space<smem>>, %arg4: memref<1xf32, #tpu.memory_space<smem>>, %arg5: memref<1x512xf32, #tpu.memory_space<vmem>>, %arg6: memref<1x8x512xf32, #tpu.memory_space<vmem>>, %arg7: memref<1x8x512xf32, #tpu.memory_space<vmem>>) attributes {dimension_semantics = [#tpu.dimension_semantics<parallel>, #tpu.dimension_semantics<parallel>, #tpu.dimension_semantics<parallel>], iteration_bounds = array<i64: 2, 1, 1>, scalar_prefetch = 0 : i64, scratch_operands = 0 : i64, tpu.core_type = #tpu.core_type<tc>, window_params = [{transform_indices = @transform_0, window_bounds = array<i64: 2>}, {transform_indices = @transform_1, window_bounds = array<i64: 1>}, {transform_indices = @transform_2, window_bounds = array<i64: 1, 512>}, {transform_indices = @transform_3, window_bounds = array<i64: 1, 8, 512>}, {transform_indices = @transform_4, window_bounds = array<i64: 1, 8, 512>}]} {
    %0 = arith.index_cast %arg0 : i32 to index
    %1 = memref.load %arg3[%0] : memref<2xf32, #tpu.memory_space<smem>>
    %c0 = arith.constant 0 : index
    %2 = memref.load %arg4[%c0] : memref<1xf32, #tpu.memory_space<smem>>
    %c0_0 = arith.constant 0 : index
    %c0_1 = arith.constant 0 : index
    %3 = vector.load %arg5[%c0_0, %c0_1] : memref<1x512xf32, #tpu.memory_space<vmem>>, vector<1x512xf32>
    %4 = vector.broadcast %1 : f32 to vector<1x512xf32>
    %5 = arith.mulf %3, %4 : vector<1x512xf32>
    %c0_2 = arith.constant 0 : index
    %c0_3 = arith.constant 0 : index
    %c0_4 = arith.constant 0 : index
    %6 = vector.load %arg6[%c0_2, %c0_3, %c0_4] : memref<1x8x512xf32, #tpu.memory_space<vmem>>, vector<1x8x512xf32>
    %7 = vector.broadcast %2 : f32 to vector<1x8x512xf32>
    %8 = arith.mulf %6, %7 : vector<1x8x512xf32>
    %9 = vector.shape_cast %5 : vector<1x512xf32> to vector<1x1x512xf32>
    %10 = vector.broadcast %9 : vector<1x1x512xf32> to vector<1x8x512xf32>
    %11 = arith.addf %8, %10 : vector<1x8x512xf32>
    %c0_5 = arith.constant 0 : index
    %c0_6 = arith.constant 0 : index
    %c0_7 = arith.constant 0 : index
    %12 = vector.load %arg7[%c0_5, %c0_6, %c0_7] : memref<1x8x512xf32, #tpu.memory_space<vmem>>, vector<1x8x512xf32>
    tpu.vector_store %arg7[%c0_5, %c0_6, %c0_7], %11 {strides = array<i32>} : memref<1x8x512xf32, #tpu.memory_space<vmem>>, vector<1x8x512xf32>,
    return
  }
  func.func @transform_0(%arg0: i32, %arg1: i32, %arg2: i32) -> i32 {
    %c0_i32 = arith.constant 0 : i32
    %c0_i32_0 = arith.constant 0 : i32
    return %c0_i32 : i32
  }
  func.func @transform_1(%arg0: i32, %arg1: i32, %arg2: i32) -> i32 {
    %c0_i32 = arith.constant 0 : i32
    %c0_i32_0 = arith.constant 0 : i32
    return %c0_i32 : i32
  }
  func.func @transform_2(%arg0: i32, %arg1: i32, %arg2: i32) -> (i32, i32) {
    %c0_i32 = arith.constant 0 : i32
    %c0_i32_0 = arith.constant 0 : i32
    return %c0_i32, %arg2 : i32, i32
  }
  func.func @transform_3(%arg0: i32, %arg1: i32, %arg2: i32) -> (i32, i32, i32) {
    %c0_i32 = arith.constant 0 : i32
    return %arg0, %arg1, %arg2 : i32, i32, i32
  }
  func.func @transform_4(%arg0: i32, %arg1: i32, %arg2: i32) -> (i32, i32, i32) {
    %c0_i32 = arith.constant 0 : i32
    return %arg0, %arg1, %arg2 : i32, i32, i32
  }
}

</mosaic_0001>

<llo_original>
// kernel: tpu_custom_call.1
$region0: #{tpu_custom_call.1}
  #allocation0 [shape = 'u32[]', space=smem, size = 0x4, offset = 0x4, fixed_abs, tag = 'smem constant byte address 0x4 - core index']
  #allocation1 [shape = 'u32[144,128]{1,0:T(1,128)}', space=vmem, size = 0x12000, scoped, tag = 'internal scratch']
  #allocation2 [shape = 'f32[1]{0:T(128)S(6)}', space=smem, size = 0x200, scoped, tag = 'scoped memory for tpu_custom_call.1']
  %s0 = inlined_call_operand.vmem [shape: f32[2], index: 0, kind: input, shape index: {}]
  %s1 = inlined_call_operand.<no memory space> [shape: f32[1], index: 1, kind: input, shape index: {}]
  %s2 = inlined_call_operand.hbm [shape: f32[1,512], index: 2, kind: input, shape index: {}]
  %s3 = inlined_call_operand.hbm [shape: f32[2,8,512], index: 3, kind: input, shape index: {}]
  %s4 = inlined_call_operand.hbm [shape: f32[2,8,512], index: 4, kind: output, shape index: {}]
  %s5 = sld [smem:[#allocation0]]
  $region61: #{tpu_custom_call.1} parent=0
    _
  %s7 = ssub.s32 1, %s5
  %s8 = scalar_select 0, %s7, %s5
  %9 = sst [smem:[#allocation2]] %s1
  $region1: #{tpu_custom_call.1} parent=0
    #allocation3 [shape = 'u8[512]{0}', space=smem, size = 0x200, scoped, tag = 'input window, operand 0, single buffered']
    #allocation4 [shape = 's32[2]{0}', space=sflag, size = 0x8, scoped, tag = 'scoped memory for tpu_custom_call.1']
    #allocation5 [shape = 's32[2]{0}', space=sflag, size = 0x8, scoped, tag = 'scoped memory for tpu_custom_call.1']
    #allocation6 [shape = 's32[2]{0}', space=sflag, size = 0x8, scoped, tag = 'scoped memory for tpu_custom_call.1']
    #allocation7 [shape = 'u8[2048]{0}', space=vmem, size = 0x800, scoped, tag = 'input window, operand 2, single buffered']
    #allocation8 [shape = 'u8[32768]{0}', space=vmem, size = 0x8000, scoped, tag = 'input window, operand 3']
    #allocation9 [shape = 's32[2]{0}', space=sflag, size = 0x8, scoped, tag = 'scoped memory for tpu_custom_call.1']
    #allocation10 [shape = 'u8[32768]{0}', space=vmem, size = 0x8000, scoped, tag = 'output window, operand 0']
    %10 = vsyncpa [#allocation6], 0
    %11 = vsyncpa [#allocation4], 0
    %12 = vsyncpa [#allocation9], 0
    %s13 = scalar_lea.sflag [#allocation9], 1
    %14 = vsyncpa %s13, 0
    %15 = vsyncpa [#allocation5], 0
    %s16 = scalar_lea.sflag [#allocation5], 1
    %17 = vsyncpa %s16, 0
    loop: start=0, step=1, limit=4
    $region2: #{tpu_custom_call.1} parent=1 // loop_pre_header
      _
    $region3: #{tpu_custom_call.1} parent=1 // loop_header
      %s19 = sphi 0, %s23
      %p20 = scmp.ge.s32.totalorder %s19, 4
      %s26 = sphi 0, %s45
      %s27 = sphi 0, %s41
      %s28 = sphi 0, %s37
      %s29 = sphi 0, %s26
      %s30 = sphi 0, %s27
      %s31 = sphi 0, %s28
      %s32 = sphi 0, %s29
      %s33 = sphi 0, %s30
      %s34 = sphi 0, %s31
      %s46 = sphi 0, %s46
      %s48 = sphi 0, %s46
      %s49 = sphi 0, %s48
      %s63 = sphi 0, %s49
      %s67 = sphi 0, %s67
      %s69 = sphi 0, %s67
      %s70 = sphi 0, %s69
      %s84 = sphi 0, %s70
      %s90 = sphi 0, %s92
      %s93 = sphi 0, %s90
      %s94 = sphi 0, %s93
      %s110 = sphi 0, %s94
      %s120 = sphi 0, %s122
      %s123 = sphi 0, %s120
      %s124 = sphi 0, %s123
      %s140 = sphi 0, %s124
      %s150 = sphi 0, %s152
      %s153 = sphi 0, %s150
      %s154 = sphi 0, %s153
      %s170 = sphi 0, %s154
    $region4: #{tpu_custom_call.1} parent=1 // loop_header_branch
      %22 = sbr.rel (%p20) target = $region8
    $region5: #{tpu_custom_call.1} parent=1 // loop_body
      %s24 = ssub.s32 %s19, 1
      %s25 = ssub.s32 %s19, 2
      %s35 = sadd.s32 1, %s28
      %p36 = scmp.ge.s32.totalorder %s35, 1
      %s37 = scalar_select %p36, 0, %s35
      %s38 = sadd.s32 1, %s27
      %s39 = scalar_select %p36, %s38, %s27
      %p40 = scmp.ge.s32.totalorder %s39, 1
      %s41 = scalar_select %p40, 0, %s39
      %s42 = sadd.s32 1, %s26
      %s43 = scalar_select %p40, %s42, %s26
      %p44 = scmp.ge.s32.totalorder %s43, 2
      %s45 = scalar_select %p44, 0, %s43
      %s47 = sadd.s32 %s46, 1
      %p50 = scmp.eq.s32.totalorder %s19, 1
      %p51 = scmp.ne.s32.totalorder %s46, %s48
      %p52 = scmp.eq.s32.totalorder %s19, 0
      %p53 = por %p51, %p52
      %p54 = scmp.ne.s32.totalorder %s46, %s48
      %p55 = scmp.eq.s32.totalorder %s24, 1
      %p56 = por %p54, %p55
      %p57 = scmp.ne.s32.totalorder %s48, %s49
      %p58 = scmp.eq.s32.totalorder %s24, 0
      %p59 = por %p57, %p58
      %p60 = scmp.ne.s32.totalorder %s48, %s49
      %p61 = scmp.eq.s32.totalorder %s25, 1
      %p62 = por %p60, %p61
      %p64 = scmp.ne.s32.totalorder %s49, %s63
      %p65 = scmp.eq.s32.totalorder %s25, 0
      %p66 = por %p64, %p65
      %s68 = sadd.s32 %s67, 1
      %p71 = scmp.eq.s32.totalorder %s19, 1
      %p72 = scmp.ne.s32.totalorder %s67, %s69
      %p73 = scmp.eq.s32.totalorder %s19, 0
      %p74 = por %p72, %p73
      %p75 = scmp.ne.s32.totalorder %s67, %s69
      %p76 = scmp.eq.s32.totalorder %s24, 1
      %p77 = por %p75, %p76
      %p78 = scmp.ne.s32.totalorder %s69, %s70
      %p79 = scmp.eq.s32.totalorder %s24, 0
      %p80 = por %p78, %p79
      %p81 = scmp.ne.s32.totalorder %s69, %s70
      %p82 = scmp.eq.s32.totalorder %s25, 1
      %p83 = por %p81, %p82
      %p85 = scmp.ne.s32.totalorder %s70, %s84
      %p86 = scmp.eq.s32.totalorder %s25, 0
      %p87 = por %p85, %p86
      %s88 = ssub.s32 %s28, %s37
      %p89 = scmp.eq.s32.totalorder %s88, 0
      %s91 = sadd.s32 %s90, 1
      %s92 = scalar_select %p89, %s90, %s91
      %p95 = pneg %p89
      %p96 = scmp.eq.s32.totalorder %s19, 1
      %p97 = por %p95, %p96
      %p98 = scmp.ne.s32.totalorder %s90, %s93
      %p99 = scmp.eq.s32.totalorder %s19, 0
      %p100 = por %p98, %p99
      %p101 = scmp.ne.s32.totalorder %s90, %s93
      %p102 = scmp.eq.s32.totalorder %s24, 1
      %p103 = por %p101, %p102
      %p104 = scmp.ne.s32.totalorder %s93, %s94
      %p105 = scmp.eq.s32.totalorder %s24, 0
      %p106 = por %p104, %p105
      %p107 = scmp.ne.s32.totalorder %s93, %s94
      %p108 = scmp.eq.s32.totalorder %s25, 1
      %p109 = por %p107, %p108
      %p111 = scmp.ne.s32.totalorder %s94, %s110
      %p112 = scmp.eq.s32.totalorder %s25, 0
      %p113 = por %p111, %p112
      %s114 = ssub.s32 %s26, %s45
      %s115 = ssub.s32 %s27, %s41
      %s116 = sor.u32 %s114, %s115
      %s117 = ssub.s32 %s28, %s37
      %s118 = sor.u32 %s116, %s117
      %p119 = scmp.eq.s32.totalorder %s118, 0
      %s121 = sadd.s32 %s120, 1
      %s122 = scalar_select %p119, %s120, %s121
      %p125 = pneg %p119
      %p126 = scmp.eq.s32.totalorder %s19, 1
      %p127 = por %p125, %p126
      %p128 = scmp.ne.s32.totalorder %s120, %s123
      %p129 = scmp.eq.s32.totalorder %s19, 0
      %p130 = por %p128, %p129
      %p131 = scmp.ne.s32.totalorder %s120, %s123
      %p132 = scmp.eq.s32.totalorder %s24, 1
      %p133 = por %p131, %p132
      %p134 = scmp.ne.s32.totalorder %s123, %s124
      %p135 = scmp.eq.s32.totalorder %s24, 0
      %p136 = por %p134, %p135
      %p137 = scmp.ne.s32.totalorder %s123, %s124
      %p138 = scmp.eq.s32.totalorder %s25, 1
      %p139 = por %p137, %p138
      %p141 = scmp.ne.s32.totalorder %s124, %s140
      %p142 = scmp.eq.s32.totalorder %s25, 0
      %p143 = por %p141, %p142
      %s144 = ssub.s32 %s26, %s45
      %s145 = ssub.s32 %s27, %s41
      %s146 = sor.u32 %s144, %s145
      %s147 = ssub.s32 %s28, %s37
      %s148 = sor.u32 %s146, %s147
      %p149 = scmp.eq.s32.totalorder %s148, 0
      %s151 = sadd.s32 %s150, 1
      %s152 = scalar_select %p149, %s150, %s151
      %p155 = pneg %p149
      %p156 = scmp.eq.s32.totalorder %s19, 1
      %p157 = por %p155, %p156
      %p158 = scmp.ne.s32.totalorder %s150, %s153
      %p159 = scmp.eq.s32.totalorder %s19, 0
      %p160 = por %p158, %p159
      %p161 = scmp.ne.s32.totalorder %s150, %s153
      %p162 = scmp.eq.s32.totalorder %s24, 1
      %p163 = por %p161, %p162
      %p164 = scmp.ne.s32.totalorder %s153, %s154
      %p165 = scmp.eq.s32.totalorder %s24, 0
      %p166 = por %p164, %p165
      %p167 = scmp.ne.s32.totalorder %s153, %s154
      %p168 = scmp.eq.s32.totalorder %s25, 1
      %p169 = por %p167, %p168
      %p171 = scmp.ne.s32.totalorder %s154, %s170
      %p172 = scmp.eq.s32.totalorder %s25, 0
      %p173 = por %p171, %p172
      %p174 = scmp.le.s32.totalorder 1, %s19
      %p175 = scmp.lt.s32.totalorder %s19, 3
      %p176 = pnand %p174, %p175
      %p177 = pneg %p176
      // Predicated region
      $region9: #{tpu_custom_call.1} parent=5 // pred_check
        _
      $region10: #{tpu_custom_call.1} parent=5 // pred_check_branch
        %179 = sbr.rel (%p176) target = $region12
      $region11: #{tpu_custom_call.1} parent=5 // pred_region
        %s180 = ssub.s32 %s19, 1
        // Predicated region
        $region13: #{tpu_custom_call.1} parent=11 // pred_check
          %p181 = pneg %p59
        $region14: #{tpu_custom_call.1} parent=11 // pred_check_branch
          %183 = sbr.rel (%p181) target = $region16
        $region15: #{tpu_custom_call.1} parent=11 // pred_region
          %s185 = ssub.s32 16, 16
          %186 = vsyncadd [#allocation6], %s185
          %s188 = sshll.u32 %s0, 4
          %s189 = int_to_ptr.vmem [resolvable:$true] %s188
          %191 = dma.vmem_to_smem %s189, 16, [#allocation3], [#allocation6]
        $region16: #{tpu_custom_call.1} parent=11 // pred_fallthru
          _
        // Predicated region
        $region17: #{tpu_custom_call.1} parent=11 // pred_check
          %p192 = pneg %p80
        $region18: #{tpu_custom_call.1} parent=11 // pred_check_branch
          %194 = sbr.rel (%p192) target = $region20
        $region19: #{tpu_custom_call.1} parent=11 // pred_region
          _
        $region20: #{tpu_custom_call.1} parent=11 // pred_fallthru
          _
        // Predicated region
        $region21: #{tpu_custom_call.1} parent=11 // pred_check
          %p195 = pneg %p106
        $region22: #{tpu_custom_call.1} parent=11 // pred_check_branch
          %197 = sbr.rel (%p195) target = $region24
        $region23: #{tpu_custom_call.1} parent=11 // pred_region
          %s198 = smul.u32 4, %s31
          %s200 = ssub.s32 64, 64
          %201 = vsyncadd [#allocation4], %s200
          %s202 = smul.addr %s198, 16
          %s203 = scalar_lea.hbm %s2, %s202
          %s205 = sshll.u32 [#allocation7], 4
          %s206 = int_to_ptr.vmem [resolvable:$true] %s205
          %208 = dma.hbm_to_vmem [thread:$0]  %s203, 64, %s206, [#allocation4]
        $region24: #{tpu_custom_call.1} parent=11 // pred_fallthru
          _
      $region12: #{tpu_custom_call.1} parent=5 // pred_fallthru
        _
      %p209 = scmp.lt.s32.totalorder %s19, 2
      // Predicated region
      $region25: #{tpu_custom_call.1} parent=5 // pred_check
        %p210 = pneg %p209
      $region26: #{tpu_custom_call.1} parent=5 // pred_check_branch
        %212 = sbr.rel (%p210) target = $region28
      $region27: #{tpu_custom_call.1} parent=5 // pred_region
        // Predicated region
        $region29: #{tpu_custom_call.1} parent=27 // pred_check
          %p213 = pneg %p130
        $region30: #{tpu_custom_call.1} parent=27 // pred_check_branch
          %215 = sbr.rel (%p213) target = $region32
        $region31: #{tpu_custom_call.1} parent=27 // pred_region
          %s216 = sand.u32 %s120, 1
          %s217 = scalar_lea.sflag [#allocation9], %s216
          %s218 = sand.u32 %s120, 1
          %s219 = smul.addr %s218, 32
          %s220 = scalar_lea.vmem [#allocation8], %s219
          %s221 = smul.u32 4, %s28
          %s223 = ssub.s32 512, 512
          %224 = vsyncadd %s217, %s223
          %s225 = smul.addr %s27, 4
          %s226 = sadd.s32 %s221, %s225
          %s227 = smul.addr %s26, 4
          %s228 = sadd.s32 %s226, %s227
          %s229 = smul.addr %s228, 128
          %s230 = scalar_lea.hbm %s3, %s229
          %s232 = sshll.u32 %s220, 4
          %s233 = int_to_ptr.vmem [resolvable:$true] %s232
          %235 = dma.hbm_to_vmem [thread:$0]  %s230, 512, %s233, %s217
        $region32: #{tpu_custom_call.1} parent=27 // pred_fallthru
          _
      $region28: #{tpu_custom_call.1} parent=5 // pred_fallthru
        _
      %p236 = scmp.le.s32.totalorder 1, %s19
      %p237 = scmp.lt.s32.totalorder %s19, 3
      %p238 = pnand %p236, %p237
      %p239 = pneg %p238
      // Predicated region
      $region33: #{tpu_custom_call.1} parent=5 // pred_check
        _
      $region34: #{tpu_custom_call.1} parent=5 // pred_check_branch
        %241 = sbr.rel (%p238) target = $region36
      $region35: #{tpu_custom_call.1} parent=5 // pred_region
        %s242 = ssub.s32 %s19, 1
        // Predicated region
        $region37: #{tpu_custom_call.1} parent=35 // pred_check
          %p243 = pneg %p59
        $region38: #{tpu_custom_call.1} parent=35 // pred_check_branch
          %245 = sbr.rel (%p243) target = $region40
        $region39: #{tpu_custom_call.1} parent=35 // pred_region
          %246 = dma.done [#allocation6], 16
        $region40: #{tpu_custom_call.1} parent=35 // pred_fallthru
          _
        // Predicated region
        $region41: #{tpu_custom_call.1} parent=35 // pred_check
          %p247 = pneg %p106
        $region42: #{tpu_custom_call.1} parent=35 // pred_check_branch
          %249 = sbr.rel (%p247) target = $region44
        $region43: #{tpu_custom_call.1} parent=35 // pred_region
          %250 = dma.done [#allocation4], 64
        $region44: #{tpu_custom_call.1} parent=35 // pred_fallthru
          _
        %s251 = sand.u32 %s123, 1
        %s252 = scalar_lea.sflag [#allocation9], %s251
        %s253 = sand.u32 %s123, 1
        %s254 = smul.addr %s253, 32
        %s255 = scalar_lea.vmem [#allocation8], %s254
        // Predicated region
        $region45: #{tpu_custom_call.1} parent=35 // pred_check
          %p256 = pneg %p136
        $region46: #{tpu_custom_call.1} parent=35 // pred_check_branch
          %258 = sbr.rel (%p256) target = $region48
        $region47: #{tpu_custom_call.1} parent=35 // pred_region
          %259 = dma.done %s252, 512
        $region48: #{tpu_custom_call.1} parent=35 // pred_fallthru
          _
        %260 = sfence
        %p261 = pneg %p59
        %p262 = pneg %p56
        %p263 = pneg %p80
        %p264 = pneg %p77
        %p265 = pneg %p106
        %p266 = pneg %p103
        %s267 = sand.u32 %s123, 1
        %s268 = scalar_lea.sflag [#allocation9], %s267
        %s269 = sand.u32 %s123, 1
        %s270 = smul.addr %s269, 32
        %s271 = scalar_lea.vmem [#allocation8], %s270
        %p272 = pneg %p136
        %p273 = pneg %p133
        %p274 = pneg %p166
        %p275 = pneg %p163
        %s276 = sand.u32 %s153, 1
        %s277 = scalar_lea.sflag [#allocation5], %s276
        %s278 = sand.u32 %s153, 1
        %s279 = smul.addr %s278, 32
        %s280 = scalar_lea.vmem [#allocation10], %s279
        %s281 = smul.u32 4, %s31
        %s282 = smul.u32 4, %s31
        %s283 = smul.u32 4, %s31
        %s284 = sld [smem:[#allocation3 + %s29]]
        %s285 = sld [smem:[#allocation2]]
        %v286 = vld [vmem:[#allocation7] sm:$0xf]
        %v287 = vstv %s284
        %v288 = vmul.f32 %v286, %v287
        %v289 = vld [vmem:[%s255] sm:$0xff]
        %v290 = vld [vmem:[%s255 + $0x8] sm:$0xff]
        %v291 = vld [vmem:[%s255 + $0x10] sm:$0xff]
        %v292 = vld [vmem:[%s255 + $0x18] sm:$0xff]
        %v293 = vstv %s285
        %v294 = vmul.f32 %v289, %v293
        %v295 = vmul.f32 %v290, %v293
        %v296 = vmul.f32 %v291, %v293
        %v297 = vmul.f32 %v292, %v293
        %v299 = vlaneseq
        %v300 = vshrl.u32 %v299, 7
        %v301 = vsub.s32 0, %v300
        %v302 = vrot.slane %v288, %v301
        %v303 = vlaneseq
        %v304 = vshrl.u32 %v303, 7
        %v305 = vsub.s32 1, %v304
        %v306 = vrot.slane %v288, %v305
        %v307 = vlaneseq
        %v308 = vshrl.u32 %v307, 7
        %v309 = vsub.s32 2, %v308
        %v310 = vrot.slane %v288, %v309
        %v311 = vlaneseq
        %v312 = vshrl.u32 %v311, 7
        %v313 = vsub.s32 3, %v312
        %v314 = vrot.slane %v288, %v313
        %v319 = vadd.f32 %v294, %v302
        %v320 = vadd.f32 %v295, %v306
        %v321 = vadd.f32 %v296, %v310
        %v322 = vadd.f32 %v297, %v314
        %323 = vst [vmem:[%s280] sm:$0xff] %v319
        %324 = vst [vmem:[%s280 + $0x8] sm:$0xff] %v320
        %325 = vst [vmem:[%s280 + $0x10] sm:$0xff] %v321
        %326 = vst [vmem:[%s280 + $0x18] sm:$0xff] %v322
        %s327 = sand.u32 %s153, 1
        %s328 = scalar_lea.sflag [#allocation5], %s327
        %s329 = sand.u32 %s153, 1
        %s330 = smul.addr %s329, 32
        %s331 = scalar_lea.vmem [#allocation10], %s330
        // Predicated region
        $region49: #{tpu_custom_call.1} parent=35 // pred_check
          %p332 = pneg %p163
        $region50: #{tpu_custom_call.1} parent=35 // pred_check_branch
          %334 = sbr.rel (%p332) target = $region52
        $region51: #{tpu_custom_call.1} parent=35 // pred_region
          %s335 = smul.u32 4, %s31
          %s337 = ssub.s32 512, 512
          %338 = vsyncadd %s328, %s337
          %s339 = smul.addr %s30, 4
          %s340 = sadd.s32 %s335, %s339
          %s341 = smul.addr %s29, 4
          %s342 = sadd.s32 %s340, %s341
          %s343 = smul.addr %s342, 128
          %s344 = scalar_lea.hbm %s4, %s343
          %s346 = sshll.u32 %s331, 4
          %s347 = int_to_ptr.vmem [resolvable:$true] %s346
          %349 = dma.vmem_to_hbm [thread:$0]  %s347, 512, %s344, %s328
        $region52: #{tpu_custom_call.1} parent=35 // pred_fallthru
          _
      $region36: #{tpu_custom_call.1} parent=5 // pred_fallthru
        _
      %p350 = scmp.le.s32.totalorder 2, %s19
      // Predicated region
      $region53: #{tpu_custom_call.1} parent=5 // pred_check
        %p351 = pneg %p350
      $region54: #{tpu_custom_call.1} parent=5 // pred_check_branch
        %353 = sbr.rel (%p351) target = $region56
      $region55: #{tpu_custom_call.1} parent=5 // pred_region
        %s354 = ssub.s32 %s19, 2
        // Predicated region
        $region57: #{tpu_custom_call.1} parent=55 // pred_check
          %p355 = pneg %p169
        $region58: #{tpu_custom_call.1} parent=55 // pred_check_branch
          %357 = sbr.rel (%p355) target = $region60
        $region59: #{tpu_custom_call.1} parent=55 // pred_region
          %s358 = sand.u32 %s154, 1
          %s359 = scalar_lea.sflag [#allocation5], %s358
          %s360 = sand.u32 %s154, 1
          %s361 = smul.addr %s360, 32
          %s362 = scalar_lea.vmem [#allocation10], %s361
          %363 = dma.done %s359, 512
        $region60: #{tpu_custom_call.1} parent=55 // pred_fallthru
          _
      $region56: #{tpu_custom_call.1} parent=5 // pred_fallthru
        _
    $region6: #{tpu_custom_call.1} parent=1 // loop_footer
      %s23 = sadd.s32 1, %s19
    $region7: #{tpu_custom_call.1} parent=1 // loop_footer_branch
      %18 = sbr.rel target = $region3
    $region8: #{tpu_custom_call.1} parent=1 // loop_exit
      _
    %364 = vsyncpa [#allocation4], 1
    %s365 = scalar_lea.sflag [#allocation4], 1
    %366 = vsyncpa %s365, 1
    %367 = vsyncpa [#allocation9], 1
    %s368 = scalar_lea.sflag [#allocation9], 1
    %369 = vsyncpa %s368, 1
    %370 = vsyncpa [#allocation5], 1
    %s371 = scalar_lea.sflag [#allocation5], 1
    %372 = vsyncpa %s371, 1
    %373 = vsyncpa [#allocation6], 1
    %s374 = scalar_lea.sflag [#allocation6], 1
    %375 = vsyncpa %s374, 1

</llo_original>
